<compile_context>
chip_gen: v7x
topology: tpu7x:2x2x1
jax: 0.10.0
libtpu: 0.0.40
codegen_flags: <defaults>
</compile_context>

<pallas_src>
import functools

import jax
import jax.numpy as jnp
import numpy as np
from jax.experimental import pallas as pl
from jax.experimental.pallas import tpu as pltpu


def _ensemble_mean_kernel(x_ref, w_ref, b_ref, pred_ref, mean_ref, *, n_models, n_classes):
    """x_ref: [TB, D]; w_ref: [M*K, D] lane-dense; b_ref: [1, K] (mean bias).

    pred_ref: [TB, 1] int32 (argmax class), mean_ref: [TB, K] f32 (mean logits).
    """
    # One fused MXU matmul for all models: contract D (dim 1 of x, dim 1 of w).
    # Result column m*K + k holds model-m / class-k logits (bias-free).
    logits_all = jax.lax.dot_general(
        x_ref[...], w_ref[...],
        dimension_numbers=(((1,), (1,)), ((), ())),
        preferred_element_type=jnp.float32,
    )  # [TB, M*K]

    # Mean over the model axis: sum the M lane-groups of width K, scale by 1/M,
    # then add the pre-averaged bias once (mean_m(x@W_m + b_m) = mean(x@W_m) + mean(b_m)).
    acc = logits_all[:, 0:n_classes]
    for m in range(1, n_models):
        acc = acc + logits_all[:, m * n_classes:(m + 1) * n_classes]
    mean = acc * jnp.float32(1.0 / n_models) + b_ref[...]
    mean_ref[...] = mean

    # argmax over classes (dim 1), first occurrence on ties (matches torch/jnp argmax).
    idx = jax.lax.broadcasted_iota(jnp.int32, mean.shape, 1)
    maxv = jnp.max(mean, axis=1, keepdims=True)
    cand = jnp.where(mean == maxv, idx, jnp.int32(n_classes))
    pred_ref[...] = jnp.min(cand, axis=1, keepdims=True).astype(jnp.int32)


def ensemble_mean_forward(x_nchw, weights, biases, labels, *, tile_b=128):
    """Ensemble mean of linear classifiers.

    x_nchw : [B, C, H, W] float32
    weights: [M, D, K]    float32   (D = C*H*W)
    biases : [M, K]       float32
    labels : [B, 1]       int32

    Returns (y_pred_label [B] int32, output_true [B] int32, mean_logits [B, K] f32).
    """
    B = x_nchw.shape[0]
    M, D, K = weights.shape
    x_flat = x_nchw.reshape(B, D).astype(jnp.float32)

    # Lane-dense weights: [M, D, K] -> [M, K, D] -> [M*K, D]  (row m*K + k = W[m, :, k]).
    w_lane = jnp.transpose(weights, (0, 2, 1)).reshape(M * K, D).astype(jnp.float32)
    # Mean bias, added once in the kernel.
    b_mean = jnp.mean(biases.astype(jnp.float32), axis=0, keepdims=True)  # [1, K]

    # B-tile (parallel) grid axis; pad B up to a tile multiple if needed.
    tb = min(tile_b, B)
    b_padded = pl.cdiv(B, tb) * tb
    if b_padded != B:
        x_flat = jnp.pad(x_flat, ((0, b_padded - B), (0, 0)))
    grid = (b_padded // tb,)

    kernel = functools.partial(_ensemble_mean_kernel, n_models=M, n_classes=K)

    pred, mean_logits = pl.pallas_call(
        kernel,
        out_shape=(
            jax.ShapeDtypeStruct((b_padded, 1), jnp.int32),
            jax.ShapeDtypeStruct((b_padded, K), jnp.float32),
        ),
        grid_spec=pltpu.PrefetchScalarGridSpec(
            num_scalar_prefetch=0,
            grid=grid,
            in_specs=[
                pl.BlockSpec((tb, D), lambda i: (i, 0)),        # x tile
                pl.BlockSpec((M * K, D), lambda i: (0, 0)),     # lane-dense W (resident)
                pl.BlockSpec((1, K), lambda i: (0, 0)),         # mean bias (resident)
            ],
            out_specs=[
                pl.BlockSpec((tb, 1), lambda i: (i, 0)),
                pl.BlockSpec((tb, K), lambda i: (i, 0)),
            ],
        ),
        compiler_params=pltpu.CompilerParams(
            dimension_semantics=("parallel",),
        ),
    )(x_flat, w_lane, b_mean)

    y_pred_label = pred[:B, 0]
    output_true = labels[:, 0]      # labels.squeeze(1) — host/JAX glue, stays outside
    return y_pred_label, output_true, mean_logits[:B]


if __name__ == "__main__":
    # Small shapes consistent with an NCHW classification batch.
    B, C, H, W = 8, 4, 16, 16
    D = C * H * W
    K = 10   # number of classes
    M = 3    # number of ensemble members

    key = jax.random.PRNGKey(0)
    kx, kw, kb, kl = jax.random.split(key, 4)

    x = jax.random.normal(kx, (B, C, H, W), dtype=jnp.float32)
    weights = jax.random.normal(kw, (M, D, K), dtype=jnp.float32) * 0.02
    biases = jax.random.normal(kb, (M, K), dtype=jnp.float32) * 0.1
    labels = jax.random.randint(kl, (B, 1), 0, K, dtype=jnp.int32)

    y_pred, y_true, mean_logits = ensemble_mean_forward(x, weights, biases, labels)
    jax.block_until_ready((y_pred, y_true, mean_logits))

    # Pure-JAX reference: per-model logits -> mean over models -> argmax over classes.
    x_flat = x.reshape(B, D)
    ref_logits = jnp.einsum("bd,mdk->mbk", x_flat, weights) + biases[:, None, :]
    ref_mean = jnp.mean(ref_logits, axis=0)
    ref_pred = jnp.argmax(ref_mean, axis=1).astype(jnp.int32)

    np.testing.assert_allclose(np.asarray(mean_logits), np.asarray(ref_mean),
                               rtol=1e-5, atol=1e-5)
    np.testing.assert_array_equal(np.asarray(y_pred), np.asarray(ref_pred))
    np.testing.assert_array_equal(np.asarray(y_true), np.asarray(labels[:, 0]))

    # TODO(synk): DataLoader iteration / tqdm / .cpu().tolist() accumulation from the
    # original module is host-side data plumbing with no Pallas equivalent.
    print("KERNEL_OK")
</pallas_src>

<mosaic_0001>
module attributes {stable_mosaic.version = 11 : i64} {
  func.func @_ensemble_mean_kernel(%arg0: i32, %arg1: memref<8x1024xf32, #tpu.memory_space<vmem>>, %arg2: memref<30x1024xf32, #tpu.memory_space<vmem>>, %arg3: memref<1x10xf32, #tpu.memory_space<vmem>>, %arg4: memref<8x1xi32, #tpu.memory_space<vmem>>, %arg5: memref<8x10xf32, #tpu.memory_space<vmem>>) attributes {dimension_semantics = [#tpu.dimension_semantics<parallel>], iteration_bounds = array<i64: 1>, scalar_prefetch = 0 : i64, scratch_operands = 0 : i64, tpu.core_type = #tpu.core_type<tc>, window_params = [{transform_indices = @transform_0, window_bounds = array<i64: 8, 1024>}, {pipeline_mode = #tpu.pipeline_mode<synchronous>, transform_indices = @transform_1, window_bounds = array<i64: 30, 1024>}, {pipeline_mode = #tpu.pipeline_mode<synchronous>, transform_indices = @transform_2, window_bounds = array<i64: 1, 10>}, {transform_indices = @transform_3, window_bounds = array<i64: 8, 1>}, {transform_indices = @transform_4, window_bounds = array<i64: 8, 10>}]} {
    %c0 = arith.constant 0 : index
    %c0_0 = arith.constant 0 : index
    %0 = vector.load %arg1[%c0, %c0_0] : memref<8x1024xf32, #tpu.memory_space<vmem>>, vector<8x1024xf32>
    %c0_1 = arith.constant 0 : index
    %c0_2 = arith.constant 0 : index
    %1 = vector.load %arg2[%c0_1, %c0_2] : memref<30x1024xf32, #tpu.memory_space<vmem>>, vector<30x1024xf32>
    %cst = arith.constant dense<0.000000e+00> : vector<8x30xf32>
    %2 = tpu.matmul %0, %1, %cst {dimension_numbers = #tpu.dot_dimension_numbers<[1], [1], [0], [0], [0, 0, 1, 0], [], []>} : vector<8x1024xf32>, vector<30x1024xf32>, vector<8x30xf32> -> vector<8x30xf32>
    %3 = vector.extract_strided_slice %2 {offsets = [0, 0], sizes = [8, 10], strides = [1, 1]} : vector<8x30xf32> to vector<8x10xf32>
    %4 = vector.extract_strided_slice %2 {offsets = [0, 10], sizes = [8, 10], strides = [1, 1]} : vector<8x30xf32> to vector<8x10xf32>
    %5 = arith.addf %3, %4 : vector<8x10xf32>
    %6 = vector.extract_strided_slice %2 {offsets = [0, 20], sizes = [8, 10], strides = [1, 1]} : vector<8x30xf32> to vector<8x10xf32>
    %7 = arith.addf %5, %6 : vector<8x10xf32>
    %cst_3 = arith.constant 0.333333343 : f32
    %8 = vector.broadcast %cst_3 : f32 to vector<8x10xf32>
    %9 = arith.mulf %7, %8 : vector<8x10xf32>
    %c0_4 = arith.constant 0 : index
    %c0_5 = arith.constant 0 : index
    %10 = vector.load %arg3[%c0_4, %c0_5] : memref<1x10xf32, #tpu.memory_space<vmem>>, vector<1x10xf32>
    %11 = vector.broadcast %10 : vector<1x10xf32> to vector<8x10xf32>
    %12 = arith.addf %9, %11 : vector<8x10xf32>
    %c0_6 = arith.constant 0 : index
    %c0_7 = arith.constant 0 : index
    %13 = vector.load %arg5[%c0_6, %c0_7] : memref<8x10xf32, #tpu.memory_space<vmem>>, vector<8x10xf32>
    tpu.vector_store %arg5[%c0_6, %c0_7], %12 {strides = array<i32>} : memref<8x10xf32, #tpu.memory_space<vmem>>, vector<8x10xf32>,
    %14 = tpu.iota {dimensions = array<i32: 1>} : vector<8x10xi32>
    %cst_8 = arith.constant dense<0xFF800000> : vector<8xf32>
    %15 = vector.multi_reduction <maximumf>, %12, %cst_8 [1] : vector<8x10xf32> to vector<8xf32>
    %16 = vector.shape_cast %15 : vector<8xf32> to vector<8x1xf32>
    %17 = vector.broadcast %16 : vector<8x1xf32> to vector<8x10xf32>
    %18 = arith.cmpf oeq, %12, %17 : vector<8x10xf32>
    %c10_i32 = arith.constant 10 : i32
    %19 = vector.broadcast %c10_i32 : i32 to vector<8x10xi32>
    %20 = arith.select %18, %14, %19 : vector<8x10xi1>, vector<8x10xi32>
    %cst_9 = arith.constant dense<2147483647> : vector<8xi32>
    %21 = vector.multi_reduction <minsi>, %20, %cst_9 [1] : vector<8x10xi32> to vector<8xi32>
    %22 = vector.shape_cast %21 : vector<8xi32> to vector<8x1xi32>
    %c0_10 = arith.constant 0 : index
    %c0_11 = arith.constant 0 : index
    %23 = vector.load %arg4[%c0_10, %c0_11] : memref<8x1xi32, #tpu.memory_space<vmem>>, vector<8x1xi32>
    tpu.vector_store %arg4[%c0_10, %c0_11], %22 {strides = array<i32>} : memref<8x1xi32, #tpu.memory_space<vmem>>, vector<8x1xi32>,
    return
  }
  func.func @transform_0(%arg0: i32) -> (i32, i32) {
    %c0_i32 = arith.constant 0 : i32
    %c0_i32_0 = arith.constant 0 : i32
    return %arg0, %c0_i32 : i32, i32
  }
  func.func @transform_1(%arg0: i32) -> (i32, i32) {
    %c0_i32 = arith.constant 0 : i32
    %c0_i32_0 = arith.constant 0 : i32
    %c0_i32_1 = arith.constant 0 : i32
    return %c0_i32, %c0_i32_0 : i32, i32
  }
  func.func @transform_2(%arg0: i32) -> (i32, i32) {
    %c0_i32 = arith.constant 0 : i32
    %c0_i32_0 = arith.constant 0 : i32
    %c0_i32_1 = arith.constant 0 : i32
    return %c0_i32, %c0_i32_0 : i32, i32
  }
  func.func @transform_3(%arg0: i32) -> (i32, i32) {
    %c0_i32 = arith.constant 0 : i32
    %c0_i32_0 = arith.constant 0 : i32
    return %arg0, %c0_i32 : i32, i32
  }
  func.func @transform_4(%arg0: i32) -> (i32, i32) {
    %c0_i32 = arith.constant 0 : i32
    %c0_i32_0 = arith.constant 0 : i32
    return %arg0, %c0_i32 : i32, i32
  }
}

</mosaic_0001>

<llo_original>
// kernel: tpu_custom_call.1
$region0: #{tpu_custom_call.1}
  #allocation0 [shape = 'u32[]', space=smem, size = 0x4, offset = 0x4, fixed_abs, tag = 'smem constant byte address 0x4 - core index']
  #allocation1 [shape = 'u32[144,128]{1,0:T(1,128)}', space=vmem, size = 0x12000, scoped, tag = 'internal scratch']
  %s0 = inlined_call_operand.hbm [shape: f32[8,1024], index: 0, kind: input, shape index: {}]
  %s1 = inlined_call_operand.hbm [shape: f32[30,1024], index: 1, kind: input, shape index: {}]
  %s2 = inlined_call_operand.vmem [shape: f32[1,10], index: 2, kind: input, shape index: {}]
  %s3 = inlined_call_operand.vmem [shape: s32[8,1], index: 3, kind: output, shape index: {0}]
  %s4 = inlined_call_operand.hbm [shape: f32[8,10], index: 4, kind: output, shape index: {1}]
  %5 = xla_tuple %s3, %s4
  %s6 = sld [smem:[#allocation0]]
  $region38: #{tpu_custom_call.1} parent=0
    _
  %s8 = ssub.s32 1, %s6
  %s9 = scalar_select 0, %s8, %s6
  $region1: #{tpu_custom_call.1} parent=0
    #allocation2 [shape = 'u8[32768]{0}', space=vmem, size = 0x8000, scoped, tag = 'input window, operand 0, single buffered']
    #allocation3 [shape = 's32[1]{0}', space=sflag, size = 0x4, scoped, tag = 'scoped memory for tpu_custom_call.1']
    #allocation4 [shape = 's32[1]{0}', space=sflag, size = 0x4, scoped, tag = 'scoped memory for tpu_custom_call.1']
    #allocation5 [shape = 'u8[131072]{0}', space=vmem, size = 0x20000, scoped, tag = 'input window, operand 1, single buffered']
    #allocation6 [shape = 's32[1]{0}', space=sflag, size = 0x4, scoped, tag = 'scoped memory for tpu_custom_call.1']
    #allocation7 [shape = 'u8[4096]{0}', space=vmem, size = 0x1000, scoped, tag = 'output window, operand 1, single buffered']
    %10 = vsyncpa [#allocation3], 0
    %11 = vsyncpa [#allocation6], 0
    %12 = vsyncpa [#allocation4], 0
    // Predicated region
    $region2: #{tpu_custom_call.1} parent=1 // pred_check
      _
    $region3: #{tpu_custom_call.1} parent=1 // pred_check_branch
      %14 = sbr.rel (0) target = $region5
    $region4: #{tpu_custom_call.1} parent=1 // pred_region
      %s16 = ssub.s32 1024, 1024
      %17 = vsyncadd [#allocation3], %s16
      %s19 = sshll.u32 [#allocation2], 4
      %s20 = int_to_ptr.vmem [resolvable:$true] %s19
      %22 = dma.hbm_to_vmem [thread:$0]  %s0, 1024, %s20, [#allocation3]
    $region5: #{tpu_custom_call.1} parent=1 // pred_fallthru
      _
    // Predicated region
    $region6: #{tpu_custom_call.1} parent=1 // pred_check
      _
    $region7: #{tpu_custom_call.1} parent=1 // pred_check_branch
      %24 = sbr.rel (0) target = $region9
    $region8: #{tpu_custom_call.1} parent=1 // pred_region
      %s26 = ssub.s32 4096, 4096
      %27 = vsyncadd [#allocation6], %s26
      %s28 = sshll.u32 [#allocation5], 4
      %s29 = int_to_ptr.vmem [resolvable:$true] %s28
      %34 = dma.hbm_to_vmem [thread:$0]  %s1, 4096, %s29, [#allocation6], 1024, 1024, 64
    $region9: #{tpu_custom_call.1} parent=1 // pred_fallthru
      _
    // Predicated region
    $region10: #{tpu_custom_call.1} parent=1 // pred_check
      _
    $region11: #{tpu_custom_call.1} parent=1 // pred_check_branch
      %36 = sbr.rel (0) target = $region13
    $region12: #{tpu_custom_call.1} parent=1 // pred_region
      _
    $region13: #{tpu_custom_call.1} parent=1 // pred_fallthru
      _
    // Predicated region
    $region14: #{tpu_custom_call.1} parent=1 // pred_check
      _
    $region15: #{tpu_custom_call.1} parent=1 // pred_check_branch
      %38 = sbr.rel (0) target = $region17
    $region16: #{tpu_custom_call.1} parent=1 // pred_region
      %39 = dma.done [#allocation3], 1024
    $region17: #{tpu_custom_call.1} parent=1 // pred_fallthru
      _
    // Predicated region
    $region18: #{tpu_custom_call.1} parent=1 // pred_check
      _
    $region19: #{tpu_custom_call.1} parent=1 // pred_check_branch
      %41 = sbr.rel (0) target = $region21
    $region20: #{tpu_custom_call.1} parent=1 // pred_region
      %42 = dma.done [#allocation6], 4096
    $region21: #{tpu_custom_call.1} parent=1 // pred_fallthru
      _
    %v43 = vld [vmem:[#allocation2] sm:$0xff]
    %v44 = vld [vmem:[#allocation2 + $0x8] sm:$0xff]
    %v45 = vld [vmem:[#allocation2 + $0x10] sm:$0xff]
    %v46 = vld [vmem:[#allocation2 + $0x18] sm:$0xff]
    %v47 = vld [vmem:[#allocation2 + $0x20] sm:$0xff]
    %v48 = vld [vmem:[#allocation2 + $0x28] sm:$0xff]
    %v49 = vld [vmem:[#allocation2 + $0x30] sm:$0xff]
    %v50 = vld [vmem:[#allocation2 + $0x38] sm:$0xff]
    %v51 = vld [vmem:[#allocation5] sm:$0xff]
    %v52 = vld [vmem:[#allocation5 + $0x8] sm:$0xff]
    %v53 = vld [vmem:[#allocation5 + $0x10] sm:$0xff]
    %v54 = vld [vmem:[#allocation5 + $0x18] sm:$0xff]
    %v55 = vld [vmem:[#allocation5 + $0x20] sm:$0xff]
    %v56 = vld [vmem:[#allocation5 + $0x28] sm:$0xff]
    %v57 = vld [vmem:[#allocation5 + $0x30] sm:$0xff]
    %v58 = vld [vmem:[#allocation5 + $0x38] sm:$0xff]
    %v59 = vld [vmem:[#allocation5 + $0x40] sm:$0xff]
    %v60 = vld [vmem:[#allocation5 + $0x48] sm:$0xff]
    %v61 = vld [vmem:[#allocation5 + $0x50] sm:$0xff]
    %v62 = vld [vmem:[#allocation5 + $0x58] sm:$0xff]
    %v63 = vld [vmem:[#allocation5 + $0x60] sm:$0xff]
    %v64 = vld [vmem:[#allocation5 + $0x68] sm:$0xff]
    %v65 = vld [vmem:[#allocation5 + $0x70] sm:$0xff]
    %v66 = vld [vmem:[#allocation5 + $0x78] sm:$0xff]
    %v67 = vld [vmem:[#allocation5 + $0x80] sm:$0xff]
    %v68 = vld [vmem:[#allocation5 + $0x88] sm:$0xff]
    %v69 = vld [vmem:[#allocation5 + $0x90] sm:$0xff]
    %v70 = vld [vmem:[#allocation5 + $0x98] sm:$0xff]
    %v71 = vld [vmem:[#allocation5 + $0xa0] sm:$0xff]
    %v72 = vld [vmem:[#allocation5 + $0xa8] sm:$0xff]
    %v73 = vld [vmem:[#allocation5 + $0xb0] sm:$0xff]
    %v74 = vld [vmem:[#allocation5 + $0xb8] sm:$0xff]
    %v75 = vld [vmem:[#allocation5 + $0xc0] sm:$0x3f]
    %v76 = vld [vmem:[#allocation5 + $0xc8] sm:$0x3f]
    %v77 = vld [vmem:[#allocation5 + $0xd0] sm:$0x3f]
    %v78 = vld [vmem:[#allocation5 + $0xd8] sm:$0x3f]
    %v79 = vld [vmem:[#allocation5 + $0xe0] sm:$0x3f]
    %v80 = vld [vmem:[#allocation5 + $0xe8] sm:$0x3f]
    %v81 = vld [vmem:[#allocation5 + $0xf0] sm:$0x3f]
    %v82 = vld [vmem:[#allocation5 + $0xf8] sm:$0x3f]
    %83 = vmatprep.subr.mxu0 %v52
    %84 = vmatpush1.xpose.msra.mxu0 %v51
    %85 = vmatprep.subr.mxu0 %v60
    %86 = vmatpush1.xpose.msra.mxu0 %v59
    %87 = vmatprep.subr.mxu0 %v68
    %88 = vmatpush1.xpose.msra.mxu0 %v67
    %89 = vmatprep.subr.mxu0 %v76
    %90 = vmatpush1.xpose.msra.mxu0 %v75
    %91 = vmatprep.subr.mxu0 0.0
    %92 = vmatpush1.xpose.msra.mxu0 0.0
    %93 = vmatprep.subr.mxu0 0.0
    %94 = vmatpush1.xpose.msra.mxu0 0.0
    %95 = vmatprep.subr.mxu0 0.0
    %96 = vmatpush1.xpose.msra.mxu0 0.0
    %97 = vmatprep.subr.mxu0 0.0
    %98 = vmatpush1.xpose.msra.mxu0 0.0
    %99 = vmatprep.subr.mxu0 0.0
    %100 = vmatpush1.xpose.msra.mxu0 0.0
    %101 = vmatprep.subr.mxu0 0.0
    %102 = vmatpush1.xpose.msra.mxu0 0.0
    %103 = vmatprep.subr.mxu0 0.0
    %104 = vmatpush1.xpose.msra.mxu0 0.0
    %105 = vmatprep.subr.mxu0 0.0
    %106 = vmatpush1.xpose.msra.mxu0 0.0
    %107 = vmatprep.subr.mxu0 0.0
    %108 = vmatpush1.xpose.msra.mxu0 0.0
    %109 = vmatprep.subr.mxu0 0.0
    %110 = vmatpush1.xpose.msra.mxu0 0.0
    %111 = vmatprep.subr.mxu0 0.0
    %112 = vmatpush1.xpose.msra.mxu0 0.0
    %113 = vmatprep.subr.mxu0 0.0
    %114 = vmatpush1.xpose.msra.mxu0 0.0
    %115 = vmatprep.subr.mxu0 0.0
    %116 = vmatpush1.xpose.msra.mxu0 0.0
    %117 = vmatprep.subr.mxu0 0.0
    %118 = vmatpush1.xpose.msra.mxu0 0.0
    %119 = vmatprep.subr.mxu0 0.0
    %120 = vmatpush1.xpose.msra.mxu0 0.0
    %121 = vmatprep.subr.mxu0 0.0
    %122 = vmatpush1.xpose.msra.mxu0 0.0
    %123 = vmatprep.subr.mxu0 0.0
    %124 = vmatpush1.xpose.msra.mxu0 0.0
    %125 = vmatprep.subr.mxu0 0.0
    %126 = vmatpush1.xpose.msra.mxu0 0.0
    %127 = vmatprep.subr.mxu0 0.0
    %128 = vmatpush1.xpose.msra.mxu0 0.0
    %129 = vmatprep.subr.mxu0 0.0
    %130 = vmatpush1.xpose.msra.mxu0 0.0
    %131 = vmatprep.subr.mxu0 0.0
    %132 = vmatpush1.xpose.msra.mxu0 0.0
    %133 = vmatprep.subr.mxu0 0.0
    %134 = vmatpush1.xpose.msra.mxu0 0.0
    %135 = vmatprep.subr.mxu0 0.0
    %136 = vmatpush1.xpose.msra.mxu0 0.0
    %137 = vmatprep.subr.mxu0 0.0
    %138 = vmatpush1.xpose.msra.mxu0 0.0
    %139 = vmatprep.subr.mxu0 0.0
    %140 = vmatpush1.xpose.msra.mxu0 0.0
    %141 = vmatprep.subr.mxu0 0.0
    %142 = vmatpush1.xpose.msra.mxu0 0.0
    %143 = vmatprep.subr.mxu0 0.0
    %144 = vmatpush1.xpose.msra.mxu0 0.0
    %145 = vmatprep.subr.mxu0 0.0
    %146 = vmatpush1.xpose.msra.mxu0 0.0
    %147 = vmatprep.mubr.f32.mxu0 %v44
    %148 = vmatmul.mubr.f32.gmra.mrb[0].mxu0 %v43
    %v149 = vpop.f32.mrb[0].mxu0
    %v150 = vadd.f32 0.0, %v149
    %v151 = vpop.f32.mrb[0].mxu0
    %152 = vdwg.mxu0
    %153 = vmatprep.subr.mxu0 %v54
    %154 = vmatpush1.xpose.msra.mxu0 %v53
    %155 = vmatprep.subr.mxu0 %v62
    %156 = vmatpush1.xpose.msra.mxu0 %v61
    %157 = vmatprep.subr.mxu0 %v70
    %158 = vmatpush1.xpose.msra.mxu0 %v69
    %159 = vmatprep.subr.mxu0 %v78
    %160 = vmatpush1.xpose.msra.mxu0 %v77
    %161 = vmatprep.subr.mxu0 0.0
    %162 = vmatpush1.xpose.msra.mxu0 0.0
    %163 = vmatprep.subr.mxu0 0.0
    %164 = vmatpush1.xpose.msra.mxu0 0.0
    %165 = vmatprep.subr.mxu0 0.0
    %166 = vmatpush1.xpose.msra.mxu0 0.0
    %167 = vmatprep.subr.mxu0 0.0
    %168 = vmatpush1.xpose.msra.mxu0 0.0
    %169 = vmatprep.subr.mxu0 0.0
    %170 = vmatpush1.xpose.msra.mxu0 0.0
    %171 = vmatprep.subr.mxu0 0.0
    %172 = vmatpush1.xpose.msra.mxu0 0.0
    %173 = vmatprep.subr.mxu0 0.0
    %174 = vmatpush1.xpose.msra.mxu0 0.0
    %175 = vmatprep.subr.mxu0 0.0
    %176 = vmatpush1.xpose.msra.mxu0 0.0
    %177 = vmatprep.subr.mxu0 0.0
    %178 = vmatpush1.xpose.msra.mxu0 0.0
    %179 = vmatprep.subr.mxu0 0.0
    %180 = vmatpush1.xpose.msra.mxu0 0.0
    %181 = vmatprep.subr.mxu0 0.0
    %182 = vmatpush1.xpose.msra.mxu0 0.0
    %183 = vmatprep.subr.mxu0 0.0
    %184 = vmatpush1.xpose.msra.mxu0 0.0
    %185 = vmatprep.subr.mxu0 0.0
    %186 = vmatpush1.xpose.msra.mxu0 0.0
    %187 = vmatprep.subr.mxu0 0.0
    %188 = vmatpush1.xpose.msra.mxu0 0.0
    %189 = vmatprep.subr.mxu0 0.0
    %190 = vmatpush1.xpose.msra.mxu0 0.0
    %191 = vmatprep.subr.mxu0 0.0
    %192 = vmatpush1.xpose.msra.mxu0 0.0
    %193 = vmatprep.subr.mxu0 0.0
    %194 = vmatpush1.xpose.msra.mxu0 0.0
    %195 = vmatprep.subr.mxu0 0.0
    %196 = vmatpush1.xpose.msra.mxu0 0.0
    %197 = vmatprep.subr.mxu0 0.0
    %198 = vmatpush1.xpose.msra.mxu0 0.0
    %199 = vmatprep.subr.mxu0 0.0
    %200 = vmatpush1.xpose.msra.mxu0 0.0
    %201 = vmatprep.subr.mxu0 0.0
    %202 = vmatpush1.xpose.msra.mxu0 0.0
    %203 = vmatprep.subr.mxu0 0.0
    %204 = vmatpush1.xpose.msra.mxu0 0.0
    %205 = vmatprep.subr.mxu0 0.0
    %206 = vmatpush1.xpose.msra.mxu0 0.0
    %207 = vmatprep.subr.mxu0 0.0
    %208 = vmatpush1.xpose.msra.mxu0 0.0
    %209 = vmatprep.subr.mxu0 0.0
    %210 = vmatpush1.xpose.msra.mxu0 0.0
    %211 = vmatprep.subr.mxu0 0.0
    %212 = vmatpush1.xpose.msra.mxu0 0.0
    %213 = vmatprep.subr.mxu0 0.0
    %214 = vmatpush1.xpose.msra.mxu0 0.0
    %215 = vmatprep.subr.mxu0 0.0
    %216 = vmatpush1.xpose.msra.mxu0 0.0
    %217 = vmatprep.mubr.f32.mxu0 %v46
    %218 = vmatmul.mubr.f32.gmra.mrb[0].mxu0 %v45
    %v219 = vpop.f32.mrb[0].mxu0
    %v220 = vadd.f32 %v150, %v219
    %v221 = vpop.f32.mrb[0].mxu0
    %222 = vdwg.mxu0
    %223 = vmatprep.subr.mxu0 %v56
    %224 = vmatpush1.xpose.msra.mxu0 %v55
    %225 = vmatprep.subr.mxu0 %v64
    %226 = vmatpush1.xpose.msra.mxu0 %v63
    %227 = vmatprep.subr.mxu0 %v72
    %228 = vmatpush1.xpose.msra.mxu0 %v71
    %229 = vmatprep.subr.mxu0 %v80
    %230 = vmatpush1.xpose.msra.mxu0 %v79
    %231 = vmatprep.subr.mxu0 0.0
    %232 = vmatpush1.xpose.msra.mxu0 0.0
    %233 = vmatprep.subr.mxu0 0.0
    %234 = vmatpush1.xpose.msra.mxu0 0.0
    %235 = vmatprep.subr.mxu0 0.0
    %236 = vmatpush1.xpose.msra.mxu0 0.0
    %237 = vmatprep.subr.mxu0 0.0
    %238 = vmatpush1.xpose.msra.mxu0 0.0
    %239 = vmatprep.subr.mxu0 0.0
    %240 = vmatpush1.xpose.msra.mxu0 0.0
    %241 = vmatprep.subr.mxu0 0.0
    %242 = vmatpush1.xpose.msra.mxu0 0.0
    %243 = vmatprep.subr.mxu0 0.0
    %244 = vmatpush1.xpose.msra.mxu0 0.0
    %245 = vmatprep.subr.mxu0 0.0
    %246 = vmatpush1.xpose.msra.mxu0 0.0
    %247 = vmatprep.subr.mxu0 0.0
    %248 = vmatpush1.xpose.msra.mxu0 0.0
    %249 = vmatprep.subr.mxu0 0.0
    %250 = vmatpush1.xpose.msra.mxu0 0.0
    %251 = vmatprep.subr.mxu0 0.0
    %252 = vmatpush1.xpose.msra.mxu0 0.0
    %253 = vmatprep.subr.mxu0 0.0
    %254 = vmatpush1.xpose.msra.mxu0 0.0
    %255 = vmatprep.subr.mxu0 0.0
    %256 = vmatpush1.xpose.msra.mxu0 0.0
    %257 = vmatprep.subr.mxu0 0.0
    %258 = vmatpush1.xpose.msra.mxu0 0.0
    %259 = vmatprep.subr.mxu0 0.0
    %260 = vmatpush1.xpose.msra.mxu0 0.0
    %261 = vmatprep.subr.mxu0 0.0
    %262 = vmatpush1.xpose.msra.mxu0 0.0
    %263 = vmatprep.subr.mxu0 0.0
    %264 = vmatpush1.xpose.msra.mxu0 0.0
    %265 = vmatprep.subr.mxu0 0.0
    %266 = vmatpush1.xpose.msra.mxu0 0.0
    %267 = vmatprep.subr.mxu0 0.0
    %268 = vmatpush1.xpose.msra.mxu0 0.0
    %269 = vmatprep.subr.mxu0 0.0
    %270 = vmatpush1.xpose.msra.mxu0 0.0
    %271 = vmatprep.subr.mxu0 0.0
    %272 = vmatpush1.xpose.msra.mxu0 0.0
    %273 = vmatprep.subr.mxu0 0.0
    %274 = vmatpush1.xpose.msra.mxu0 0.0
    %275 = vmatprep.subr.mxu0 0.0
    %276 = vmatpush1.xpose.msra.mxu0 0.0
    %277 = vmatprep.subr.mxu0 0.0
    %278 = vmatpush1.xpose.msra.mxu0 0.0
    %279 = vmatprep.subr.mxu0 0.0
    %280 = vmatpush1.xpose.msra.mxu0 0.0
    %281 = vmatprep.subr.mxu0 0.0
    %282 = vmatpush1.xpose.msra.mxu0 0.0
    %283 = vmatprep.subr.mxu0 0.0
    %284 = vmatpush1.xpose.msra.mxu0 0.0
    %285 = vmatprep.subr.mxu0 0.0
    %286 = vmatpush1.xpose.msra.mxu0 0.0
    %287 = vmatprep.mubr.f32.mxu0 %v48
    %288 = vmatmul.mubr.f32.gmra.mrb[0].mxu0 %v47
    %v289 = vpop.f32.mrb[0].mxu0
    %v290 = vadd.f32 %v220, %v289
    %v291 = vpop.f32.mrb[0].mxu0
    %292 = vdwg.mxu0
    %293 = vmatprep.subr.mxu0 %v58
    %294 = vmatpush1.xpose.msra.mxu0 %v57
    %295 = vmatprep.subr.mxu0 %v66
    %296 = vmatpush1.xpose.msra.mxu0 %v65
    %297 = vmatprep.subr.mxu0 %v74
    %298 = vmatpush1.xpose.msra.mxu0 %v73
    %299 = vmatprep.subr.mxu0 %v82
    %300 = vmatpush1.xpose.msra.mxu0 %v81
    %301 = vmatprep.subr.mxu0 0.0
    %302 = vmatpush1.xpose.msra.mxu0 0.0
    %303 = vmatprep.subr.mxu0 0.0
    %304 = vmatpush1.xpose.msra.mxu0 0.0
    %305 = vmatprep.subr.mxu0 0.0
    %306 = vmatpush1.xpose.msra.mxu0 0.0
    %307 = vmatprep.subr.mxu0 0.0
    %308 = vmatpush1.xpose.msra.mxu0 0.0
    %309 = vmatprep.subr.mxu0 0.0
    %310 = vmatpush1.xpose.msra.mxu0 0.0
    %311 = vmatprep.subr.mxu0 0.0
    %312 = vmatpush1.xpose.msra.mxu0 0.0
    %313 = vmatprep.subr.mxu0 0.0
    %314 = vmatpush1.xpose.msra.mxu0 0.0
    %315 = vmatprep.subr.mxu0 0.0
    %316 = vmatpush1.xpose.msra.mxu0 0.0
    %317 = vmatprep.subr.mxu0 0.0
    %318 = vmatpush1.xpose.msra.mxu0 0.0
    %319 = vmatprep.subr.mxu0 0.0
    %320 = vmatpush1.xpose.msra.mxu0 0.0
    %321 = vmatprep.subr.mxu0 0.0
    %322 = vmatpush1.xpose.msra.mxu0 0.0
    %323 = vmatprep.subr.mxu0 0.0
    %324 = vmatpush1.xpose.msra.mxu0 0.0
    %325 = vmatprep.subr.mxu0 0.0
    %326 = vmatpush1.xpose.msra.mxu0 0.0
    %327 = vmatprep.subr.mxu0 0.0
    %328 = vmatpush1.xpose.msra.mxu0 0.0
    %329 = vmatprep.subr.mxu0 0.0
    %330 = vmatpush1.xpose.msra.mxu0 0.0
    %331 = vmatprep.subr.mxu0 0.0
    %332 = vmatpush1.xpose.msra.mxu0 0.0
    %333 = vmatprep.subr.mxu0 0.0
    %334 = vmatpush1.xpose.msra.mxu0 0.0
    %335 = vmatprep.subr.mxu0 0.0
    %336 = vmatpush1.xpose.msra.mxu0 0.0
    %337 = vmatprep.subr.mxu0 0.0
    %338 = vmatpush1.xpose.msra.mxu0 0.0
    %339 = vmatprep.subr.mxu0 0.0
    %340 = vmatpush1.xpose.msra.mxu0 0.0
    %341 = vmatprep.subr.mxu0 0.0
    %342 = vmatpush1.xpose.msra.mxu0 0.0
    %343 = vmatprep.subr.mxu0 0.0
    %344 = vmatpush1.xpose.msra.mxu0 0.0
    %345 = vmatprep.subr.mxu0 0.0
    %346 = vmatpush1.xpose.msra.mxu0 0.0
    %347 = vmatprep.subr.mxu0 0.0
    %348 = vmatpush1.xpose.msra.mxu0 0.0
    %349 = vmatprep.subr.mxu0 0.0
    %350 = vmatpush1.xpose.msra.mxu0 0.0
    %351 = vmatprep.subr.mxu0 0.0
    %352 = vmatpush1.xpose.msra.mxu0 0.0
    %353 = vmatprep.subr.mxu0 0.0
    %354 = vmatpush1.xpose.msra.mxu0 0.0
    %355 = vmatprep.subr.mxu0 0.0
    %356 = vmatpush1.xpose.msra.mxu0 0.0
    %357 = vmatprep.mubr.f32.mxu0 %v50
    %358 = vmatmul.mubr.f32.gmra.mrb[0].mxu0 %v49
    %v359 = vpop.f32.mrb[0].mxu0
    %v360 = vadd.f32 %v290, %v359
    %v361 = vpop.f32.mrb[0].mxu0
    %362 = vdwg.mxu0
    %364 = vrot.lane.b32.xlu0 %v360, 118
    %v365 = vpop.permute.xlu0 %364
    %v367 = vadd.f32 %v360, %v365
    %368 = vrot.lane.b32.xlu0 %v360, 108
    %v369 = vpop.permute.xlu0 %368
    %v371 = vadd.f32 %v367, %v369
    %v372 = vmul.f32 %v371, 0.33333334
    %v373 = vld [vmem:[%s2] sm:$0x1]
    %v375 = vlaneseq
    %v376 = vshrl.u32 %v375, 7
    %v377 = vsub.s32 0, %v376
    %v378 = vrot.slane %v373, %v377
    %v380 = vadd.f32 %v372, %v378
    %vm381 = vcmask 80896
    %382 = vst.msk [vmem:[#allocation7] sm:$0xff] %vm381, %v380
    %v383 = vlaneseq
    %v384 = vand.u32 %v383, 127
    %v385 = vsel %vm381, %v380, -inf
    %386 = vmax.xlane.f32.xlu0 %v385
    %v387 = vpop.xlane.xlu0 %386
    %vm388 = vcmp.eq.f32.partialorder %v380, %v387
    %v389 = vsel %vm388, %v384, 10
    %v390 = vsel %vm381, %v389, 2147483647
    %v391 = vand.u32 %v390, 65535
    %v392 = vshra.s32 %v390, 16
    %v393 = vcvt.s32.f32 %v391
    %v394 = vcvt.s32.f32 %v392
    %395 = vmin.xlane.f32.xlu0 %v394
    %v396 = vpop.xlane.xlu0 %395
    %vm397 = vcmp.eq.f32.partialorder %v394, %v396
    %v398 = vsel %vm397, %v393, inf
    %399 = vmin.xlane.f32.xlu0 %v398
    %v400 = vpop.xlane.xlu0 %399
    %v401 = vcvt.f32.s32 %v400
    %v402 = vcvt.f32.s32 %v396
    %v403 = vshll.u32 %v402, 16
    %v404 = vadd.s32 %v403, %v401
    %vm405 = vcmask 7168
    %406 = vst.msk [vmem:[%s3] sm:$0xff] %vm405, %v404
    // Predicated region
    $region22: #{tpu_custom_call.1} parent=1 // pred_check
      _
    $region23: #{tpu_custom_call.1} parent=1 // pred_check_branch
      %408 = sbr.rel (0) target = $region25
    $region24: #{tpu_custom_call.1} parent=1 // pred_region
      _
    $region25: #{tpu_custom_call.1} parent=1 // pred_fallthru
      _
    // Predicated region
    $region26: #{tpu_custom_call.1} parent=1 // pred_check
      _
    $region27: #{tpu_custom_call.1} parent=1 // pred_check_branch
      %410 = sbr.rel (0) target = $region29
    $region28: #{tpu_custom_call.1} parent=1 // pred_region
      %s412 = ssub.s32 128, 128
      %413 = vsyncadd [#allocation4], %s412
      %s415 = sshll.u32 [#allocation7], 4
      %s416 = int_to_ptr.vmem [resolvable:$true] %s415
      %418 = dma.vmem_to_hbm [thread:$0]  %s416, 128, %s4, [#allocation4]
    $region29: #{tpu_custom_call.1} parent=1 // pred_fallthru
      _
    // Predicated region
    $region30: #{tpu_custom_call.1} parent=1 // pred_check
      _
    $region31: #{tpu_custom_call.1} parent=1 // pred_check_branch
      %420 = sbr.rel (0) target = $region33
    $region32: #{tpu_custom_call.1} parent=1 // pred_region
      _
    $region33: #{tpu_custom_call.1} parent=1 // pred_fallthru
      _
    // Predicated region
    $region34: #{tpu_custom_call.1} parent=1 // pred_check
      _
    $region35: #{tpu_custom_call.1} parent=1 // pred_check_branch
      %422 = sbr.rel (0) target = $region37
    $region36: #{tpu_custom_call.1} parent=1 // pred_region
      %423 = dma.done [#allocation4], 128
    $region37: #{tpu_custom_call.1} parent=1 // pred_fallthru
      _
    %424 = vsyncpa [#allocation3], 1
    %425 = vsyncpa [#allocation6], 1
    %426 = vsyncpa [#allocation4], 1

</llo_original>
